<compile_context>
chip_gen: v7x
topology: tpu7x:2x2x1
jax: 0.10.0
libtpu: 0.0.40
codegen_flags: <defaults>
</compile_context>

<pallas_src>
import functools

import jax
import jax.numpy as jnp
from jax.experimental import pallas as pl
from jax.experimental.pallas import tpu as pltpu


def _branch_ones_trunk_kernel(*refs, n_layers):
    """refs = (x, W1, b1, W2, b2, ..., WL, bL, out).

    Layout: features on sublanes, batch on lanes.
      x_ref   : [dim, BT]          (momenta^T tile)
      W_i     : [out_i, in_i]      (PyTorch layout; used directly, no .T)
      b_i     : [out_i, 1]         (lane-broadcast bias)
      out_ref : [dim, BT]          (trunk==ones contraction already folded into W_L/b_L)
    """
    x_ref = refs[0]
    out_ref = refs[-1]
    wb = refs[1:-1]
    assert len(wb) == 2 * n_layers

    z = x_ref[...].astype(jnp.float32)                  # [in, BT]

    # Hidden layers: z = tanh(W @ z + b)   (MXU matmul, EUP tanh)
    for i in range(n_layers - 1):
        w = wb[2 * i][...].astype(jnp.float32)          # [out, in]
        b = wb[2 * i + 1][...].astype(jnp.float32)      # [out, 1]
        z = jnp.tanh(jnp.dot(w, z, preferred_element_type=jnp.float32) + b)

    # Folded head: [dim, BT] directly == sum_K branch(x)[:, d, K]
    w_last = wb[-2][...].astype(jnp.float32)            # [dim, hidden]
    b_last = wb[-1][...].astype(jnp.float32)            # [dim, 1]
    out = jnp.dot(w_last, z, preferred_element_type=jnp.float32) + b_last
    out_ref[...] = out.astype(out_ref.dtype)


def _round_up(x, m):
    return ((x + m - 1) // m) * m


def deeponet_forward(momenta, t, branch_weights, branch_biases, *, dim, K,
                     activation="tanh", batch_tile=None, expand_time=True):
    """Pallas implementation of DeepONet.forward with scheme=None.

    momenta : [U, dim]  (dim = 2*N)
    t       : [T, 1]    (trunk output is overwritten with ones in the reference
                         forward, so only T matters for the result)
    returns : [U, T, dim]  (or the t-independent [U, dim] if expand_time=False)
    """
    if activation != "tanh":
        raise NotImplementedError("kernel implements the activation='tanh' module")

    U = momenta.shape[0]
    T = t.shape[0]
    n_layers = len(branch_weights)
    assert branch_weights[-1].shape[0] == dim * K

    # ---- fold the all-ones trunk into the last layer (exact) --------------------
    hidden = branch_weights[-1].shape[1]
    w_fold = branch_weights[-1].reshape(dim, K, hidden).sum(axis=1)   # [dim, hidden]
    b_fold = branch_biases[-1].reshape(dim, K).sum(axis=1)            # [dim]
    weights = list(branch_weights[:-1]) + [w_fold]
    biases = list(branch_biases[:-1]) + [b_fold]

    # ---- layout: features on sublanes, batch on lanes (lane-dense) --------------
    U_pad = _round_up(max(U, 128), 128)        # pad lanes to 128 only
    if batch_tile is None:
        if U_pad <= 256:
            batch_tile = 128
        else:
            # >=2 grid steps (v7x megacore), tile capped at 2048 lanes
            half = max(128, (U_pad // 2) // 128 * 128)
            batch_tile = min(2048, half)
    batch_tile = min(batch_tile, U_pad)
    grid = pl.cdiv(U_pad, batch_tile)          # partial last block is fine (columnwise)

    x = jnp.zeros((dim, U_pad), momenta.dtype).at[:, :U].set(momenta.T)

    args = [x]
    in_specs = [pl.BlockSpec((dim, batch_tile), lambda i: (0, i))]
    for w, b in zip(weights, biases):
        args.append(w)                                  # [out, in] -- unchanged layout
        args.append(b.reshape(-1, 1))                   # [out, 1]
        in_specs.append(pl.BlockSpec(w.shape, lambda i: (0, 0)))          # VMEM-resident
        in_specs.append(pl.BlockSpec((w.shape[0], 1), lambda i: (0, 0)))  # across grid

    # Advisory cost hint (folded head dims).
    flops = 2 * U_pad * sum(int(w.shape[0]) * int(w.shape[1]) for w in weights)
    transcendentals = U_pad * sum(int(w.shape[0]) for w in weights[:-1])
    bytes_accessed = 4 * (int(x.size) + sum(int(a.size) for a in args[1:]) + dim * U_pad)

    kernel = functools.partial(_branch_ones_trunk_kernel, n_layers=n_layers)

    out_fm = pl.pallas_call(
        kernel,
        out_shape=jax.ShapeDtypeStruct((dim, U_pad), momenta.dtype),
        grid=(grid,),
        in_specs=in_specs,
        out_specs=pl.BlockSpec((dim, batch_tile), lambda i: (0, i)),
        compiler_params=pltpu.CompilerParams(dimension_semantics=("parallel",)),
        cost_estimate=pl.CostEstimate(flops=int(flops),
                                      transcendentals=int(transcendentals),
                                      bytes_accessed=int(bytes_accessed)),
    )(*args)                                             # [dim, U_pad]

    # Wrapper-side layout plumbing: drop padding, back to batch-major.
    out_ud = out_fm[:, :U].T                             # [U, dim]
    if not expand_time:
        return out_ud                                    # t-independent result
    # Trunk output is all-ones under scheme=None, so the result is t-independent;
    # this broadcast is pure HBM writeback and fuses into consumers under jit.
    return jnp.broadcast_to(out_ud[:, None, :], (U, T, dim))


# ----------------------------- test harness ---------------------------------

def _init_mlp(key, sizes):
    """xavier_normal weights ([out, in]), zero biases — matches the PyTorch init."""
    ws, bs = [], []
    for i in range(1, len(sizes)):
        fan_in, fan_out = sizes[i - 1], sizes[i]
        key, sub = jax.random.split(key)
        std = jnp.sqrt(2.0 / (fan_in + fan_out))
        ws.append(std * jax.random.normal(sub, (fan_out, fan_in), dtype=jnp.float32))
        bs.append(jnp.zeros((fan_out,), dtype=jnp.float32))
    return key, ws, bs


def _reference(momenta, t, bw, bb, tw, tb, dim, K):
    """Pure-JAX mirror of DeepONet.forward with scheme=None, activation=tanh."""
    z = momenta
    for w, b in zip(bw[:-1], bb[:-1]):
        z = jnp.tanh(z @ w.T + b)
    z = z @ bw[-1].T + bb[-1]
    branch_out = z.reshape(z.shape[0], dim, K)           # [U, dim, K]

    zt = t
    for w, b in zip(tw[:-1], tb[:-1]):
        zt = jnp.tanh(zt @ w.T + b)
    zt = zt @ tw[-1].T + tb[-1]                          # [T, K]
    trunk_out = jnp.ones_like(zt)                        # scheme=None path

    return jnp.einsum('udK,tK->utd', branch_out, trunk_out)


if __name__ == "__main__":
    key = jax.random.PRNGKey(0)
    N, K = 1, 2
    dim = 2 * N
    layer_sizes_branch = [32, 32]
    layer_sizes_trunk = [32, 32]

    key, bw, bb = _init_mlp(key, [dim] + layer_sizes_branch + [dim * K])
    key, tw, tb = _init_mlp(key, [1] + layer_sizes_trunk + [K])

    # Small case (single grid step).
    U, T = 8, 16
    key, km = jax.random.split(key)
    momenta = jax.random.normal(km, (U, dim), dtype=jnp.float32)
    t = jnp.linspace(0.0, 1.0, T, dtype=jnp.float32).reshape(T, 1)

    out = deeponet_forward(momenta, t, bw, bb, dim=dim, K=K, activation="tanh")
    out = jax.block_until_ready(out)
    ref = _reference(momenta, t, bw, bb, tw, tb, dim, K)
    assert out.shape == (U, T, dim)
    assert jnp.allclose(out, ref, atol=1e-5, rtol=1e-4), "mismatch vs reference (small)"

    # Multi-step grid + partial last block case.
    U2, T2 = 600, 3
    key, km2 = jax.random.split(key)
    momenta2 = jax.random.normal(km2, (U2, dim), dtype=jnp.float32)
    t2 = jnp.linspace(0.0, 1.0, T2, dtype=jnp.float32).reshape(T2, 1)

    out2 = deeponet_forward(momenta2, t2, bw, bb, dim=dim, K=K, activation="tanh")
    out2 = jax.block_until_ready(out2)
    ref2 = _reference(momenta2, t2, bw, bb, tw, tb, dim, K)
    assert out2.shape == (U2, T2, dim)
    assert jnp.allclose(out2, ref2, atol=1e-5, rtol=1e-4), "mismatch vs reference (tiled)"

    print("KERNEL_OK")
</pallas_src>

<mosaic_0001>
module attributes {stable_mosaic.version = 11 : i64} {
  func.func @_branch_ones_trunk_kernel(%arg0: i32, %arg1: memref<2x128xf32, #tpu.memory_space<vmem>>, %arg2: memref<32x2xf32, #tpu.memory_space<vmem>>, %arg3: memref<32x1xf32, #tpu.memory_space<vmem>>, %arg4: memref<32x32xf32, #tpu.memory_space<vmem>>, %arg5: memref<32x1xf32, #tpu.memory_space<vmem>>, %arg6: memref<2x32xf32, #tpu.memory_space<vmem>>, %arg7: memref<2x1xf32, #tpu.memory_space<vmem>>, %arg8: memref<2x128xf32, #tpu.memory_space<vmem>>) attributes {dimension_semantics = [#tpu.dimension_semantics<parallel>], iteration_bounds = array<i64: 1>, scalar_prefetch = 0 : i64, scratch_operands = 0 : i64, tpu.core_type = #tpu.core_type<tc>, window_params = [{transform_indices = @transform_0, window_bounds = array<i64: 2, 128>}, {pipeline_mode = #tpu.pipeline_mode<synchronous>, transform_indices = @transform_1, window_bounds = array<i64: 32, 2>}, {pipeline_mode = #tpu.pipeline_mode<synchronous>, transform_indices = @transform_2, window_bounds = array<i64: 32, 1>}, {pipeline_mode = #tpu.pipeline_mode<synchronous>, transform_indices = @transform_3, window_bounds = array<i64: 32, 32>}, {pipeline_mode = #tpu.pipeline_mode<synchronous>, transform_indices = @transform_4, window_bounds = array<i64: 32, 1>}, {pipeline_mode = #tpu.pipeline_mode<synchronous>, transform_indices = @transform_5, window_bounds = array<i64: 2, 32>}, {pipeline_mode = #tpu.pipeline_mode<synchronous>, transform_indices = @transform_6, window_bounds = array<i64: 2, 1>}, {transform_indices = @transform_7, window_bounds = array<i64: 2, 128>}]} {
    %c0 = arith.constant 0 : index
    %c0_0 = arith.constant 0 : index
    %0 = vector.load %arg1[%c0, %c0_0] : memref<2x128xf32, #tpu.memory_space<vmem>>, vector<2x128xf32>
    %c0_1 = arith.constant 0 : index
    %c0_2 = arith.constant 0 : index
    %1 = vector.load %arg2[%c0_1, %c0_2] : memref<32x2xf32, #tpu.memory_space<vmem>>, vector<32x2xf32>
    %c0_3 = arith.constant 0 : index
    %c0_4 = arith.constant 0 : index
    %2 = vector.load %arg3[%c0_3, %c0_4] : memref<32x1xf32, #tpu.memory_space<vmem>>, vector<32x1xf32>
    %cst = arith.constant dense<0.000000e+00> : vector<32x128xf32>
    %3 = tpu.matmul %1, %0, %cst {dimension_numbers = #tpu.dot_dimension_numbers<[1], [0], [0], [1], [0, 0, 1, 1], [], []>} : vector<32x2xf32>, vector<2x128xf32>, vector<32x128xf32> -> vector<32x128xf32>
    %4 = vector.broadcast %2 : vector<32x1xf32> to vector<32x128xf32>
    %5 = arith.addf %3, %4 : vector<32x128xf32>
    %6 = math.tanh %5 : vector<32x128xf32>
    %c0_5 = arith.constant 0 : index
    %c0_6 = arith.constant 0 : index
    %7 = vector.load %arg4[%c0_5, %c0_6] : memref<32x32xf32, #tpu.memory_space<vmem>>, vector<32x32xf32>
    %c0_7 = arith.constant 0 : index
    %c0_8 = arith.constant 0 : index
    %8 = vector.load %arg5[%c0_7, %c0_8] : memref<32x1xf32, #tpu.memory_space<vmem>>, vector<32x1xf32>
    %cst_9 = arith.constant dense<0.000000e+00> : vector<32x128xf32>
    %9 = tpu.matmul %7, %6, %cst_9 {dimension_numbers = #tpu.dot_dimension_numbers<[1], [0], [0], [1], [0, 0, 1, 1], [], []>} : vector<32x32xf32>, vector<32x128xf32>, vector<32x128xf32> -> vector<32x128xf32>
    %10 = vector.broadcast %8 : vector<32x1xf32> to vector<32x128xf32>
    %11 = arith.addf %9, %10 : vector<32x128xf32>
    %12 = math.tanh %11 : vector<32x128xf32>
    %c0_10 = arith.constant 0 : index
    %c0_11 = arith.constant 0 : index
    %13 = vector.load %arg6[%c0_10, %c0_11] : memref<2x32xf32, #tpu.memory_space<vmem>>, vector<2x32xf32>
    %c0_12 = arith.constant 0 : index
    %c0_13 = arith.constant 0 : index
    %14 = vector.load %arg7[%c0_12, %c0_13] : memref<2x1xf32, #tpu.memory_space<vmem>>, vector<2x1xf32>
    %cst_14 = arith.constant dense<0.000000e+00> : vector<2x128xf32>
    %15 = tpu.matmul %13, %12, %cst_14 {dimension_numbers = #tpu.dot_dimension_numbers<[1], [0], [0], [1], [0, 0, 1, 1], [], []>} : vector<2x32xf32>, vector<32x128xf32>, vector<2x128xf32> -> vector<2x128xf32>
    %16 = vector.broadcast %14 : vector<2x1xf32> to vector<2x128xf32>
    %17 = arith.addf %15, %16 : vector<2x128xf32>
    %c0_15 = arith.constant 0 : index
    %c0_16 = arith.constant 0 : index
    %18 = vector.load %arg8[%c0_15, %c0_16] : memref<2x128xf32, #tpu.memory_space<vmem>>, vector<2x128xf32>
    tpu.vector_store %arg8[%c0_15, %c0_16], %17 {strides = array<i32>} : memref<2x128xf32, #tpu.memory_space<vmem>>, vector<2x128xf32>,
    return
  }
  func.func @transform_0(%arg0: i32) -> (i32, i32) {
    %c0_i32 = arith.constant 0 : i32
    %c0_i32_0 = arith.constant 0 : i32
    return %c0_i32, %arg0 : i32, i32
  }
  func.func @transform_1(%arg0: i32) -> (i32, i32) {
    %c0_i32 = arith.constant 0 : i32
    %c0_i32_0 = arith.constant 0 : i32
    %c0_i32_1 = arith.constant 0 : i32
    return %c0_i32, %c0_i32_0 : i32, i32
  }
  func.func @transform_2(%arg0: i32) -> (i32, i32) {
    %c0_i32 = arith.constant 0 : i32
    %c0_i32_0 = arith.constant 0 : i32
    %c0_i32_1 = arith.constant 0 : i32
    return %c0_i32, %c0_i32_0 : i32, i32
  }
  func.func @transform_3(%arg0: i32) -> (i32, i32) {
    %c0_i32 = arith.constant 0 : i32
    %c0_i32_0 = arith.constant 0 : i32
    %c0_i32_1 = arith.constant 0 : i32
    return %c0_i32, %c0_i32_0 : i32, i32
  }
  func.func @transform_4(%arg0: i32) -> (i32, i32) {
    %c0_i32 = arith.constant 0 : i32
    %c0_i32_0 = arith.constant 0 : i32
    %c0_i32_1 = arith.constant 0 : i32
    return %c0_i32, %c0_i32_0 : i32, i32
  }
  func.func @transform_5(%arg0: i32) -> (i32, i32) {
    %c0_i32 = arith.constant 0 : i32
    %c0_i32_0 = arith.constant 0 : i32
    %c0_i32_1 = arith.constant 0 : i32
    return %c0_i32, %c0_i32_0 : i32, i32
  }
  func.func @transform_6(%arg0: i32) -> (i32, i32) {
    %c0_i32 = arith.constant 0 : i32
    %c0_i32_0 = arith.constant 0 : i32
    %c0_i32_1 = arith.constant 0 : i32
    return %c0_i32, %c0_i32_0 : i32, i32
  }
  func.func @transform_7(%arg0: i32) -> (i32, i32) {
    %c0_i32 = arith.constant 0 : i32
    %c0_i32_0 = arith.constant 0 : i32
    return %c0_i32, %arg0 : i32, i32
  }
}

</mosaic_0001>

<llo_original>
// kernel: tpu_custom_call.1
$region0: #{tpu_custom_call.1}
  #allocation0 [shape = 'u32[]', space=smem, size = 0x4, offset = 0x4, fixed_abs, tag = 'smem constant byte address 0x4 - core index']
  #allocation1 [shape = 'u32[144,128]{1,0:T(1,128)}', space=vmem, size = 0x12000, scoped, tag = 'internal scratch']
  %s0 = inlined_call_operand.vmem [shape: f32[2,128], index: 0, kind: input, shape index: {}]
  %s1 = inlined_call_operand.vmem [shape: f32[32,2], index: 1, kind: input, shape index: {}]
  %s2 = inlined_call_operand.vmem [shape: f32[32,1], index: 2, kind: input, shape index: {}]
  %s3 = inlined_call_operand.vmem [shape: f32[32,32], index: 3, kind: input, shape index: {}]
  %s4 = inlined_call_operand.vmem [shape: f32[32,1], index: 4, kind: input, shape index: {}]
  %s5 = inlined_call_operand.vmem [shape: f32[2,32], index: 5, kind: input, shape index: {}]
  %s6 = inlined_call_operand.vmem [shape: f32[2,1], index: 6, kind: input, shape index: {}]
  %s7 = inlined_call_operand.hbm [shape: f32[2,128], index: 7, kind: output, shape index: {}]
  %s8 = sld [smem:[#allocation0]]
  $region38: #{tpu_custom_call.1} parent=0
    _
  %s10 = ssub.s32 1, %s8
  %s11 = scalar_select 0, %s10, %s8
  $region1: #{tpu_custom_call.1} parent=0
    #allocation2 [shape = 'u8[1024]{0}', space=vmem, size = 0x400, scoped, tag = 'output window, operand 0, single buffered']
    #allocation3 [shape = 's32[1]{0}', space=sflag, size = 0x4, scoped, tag = 'scoped memory for tpu_custom_call.1']
    %12 = vsyncpa [#allocation3], 0
    // Predicated region
    $region2: #{tpu_custom_call.1} parent=1 // pred_check
      _
    $region3: #{tpu_custom_call.1} parent=1 // pred_check_branch
      %14 = sbr.rel (0) target = $region5
    $region4: #{tpu_custom_call.1} parent=1 // pred_region
      _
    $region5: #{tpu_custom_call.1} parent=1 // pred_fallthru
      _
    // Predicated region
    $region6: #{tpu_custom_call.1} parent=1 // pred_check
      _
    $region7: #{tpu_custom_call.1} parent=1 // pred_check_branch
      %16 = sbr.rel (0) target = $region9
    $region8: #{tpu_custom_call.1} parent=1 // pred_region
      _
    $region9: #{tpu_custom_call.1} parent=1 // pred_fallthru
      _
    // Predicated region
    $region10: #{tpu_custom_call.1} parent=1 // pred_check
      _
    $region11: #{tpu_custom_call.1} parent=1 // pred_check_branch
      %18 = sbr.rel (0) target = $region13
    $region12: #{tpu_custom_call.1} parent=1 // pred_region
      _
    $region13: #{tpu_custom_call.1} parent=1 // pred_fallthru
      _
    // Predicated region
    $region14: #{tpu_custom_call.1} parent=1 // pred_check
      _
    $region15: #{tpu_custom_call.1} parent=1 // pred_check_branch
      %20 = sbr.rel (0) target = $region17
    $region16: #{tpu_custom_call.1} parent=1 // pred_region
      _
    $region17: #{tpu_custom_call.1} parent=1 // pred_fallthru
      _
    // Predicated region
    $region18: #{tpu_custom_call.1} parent=1 // pred_check
      _
    $region19: #{tpu_custom_call.1} parent=1 // pred_check_branch
      %22 = sbr.rel (0) target = $region21
    $region20: #{tpu_custom_call.1} parent=1 // pred_region
      _
    $region21: #{tpu_custom_call.1} parent=1 // pred_fallthru
      _
    // Predicated region
    $region22: #{tpu_custom_call.1} parent=1 // pred_check
      _
    $region23: #{tpu_custom_call.1} parent=1 // pred_check_branch
      %24 = sbr.rel (0) target = $region25
    $region24: #{tpu_custom_call.1} parent=1 // pred_region
      _
    $region25: #{tpu_custom_call.1} parent=1 // pred_fallthru
      _
    // Predicated region
    $region26: #{tpu_custom_call.1} parent=1 // pred_check
      _
    $region27: #{tpu_custom_call.1} parent=1 // pred_check_branch
      %26 = sbr.rel (0) target = $region29
    $region28: #{tpu_custom_call.1} parent=1 // pred_region
      _
    $region29: #{tpu_custom_call.1} parent=1 // pred_fallthru
      _
    %v27 = vld [vmem:[%s0] sm:$0x3]
    %v28 = vld [vmem:[%s1] sm:$0xff]
    %v29 = vld [vmem:[%s1 + $0x8] sm:$0xff]
    %v30 = vld [vmem:[%s1 + $0x10] sm:$0xff]
    %v31 = vld [vmem:[%s1 + $0x18] sm:$0xff]
    %v32 = vld [vmem:[%s2] sm:$0xff]
    %v33 = vld [vmem:[%s2 + $0x8] sm:$0xff]
    %v34 = vld [vmem:[%s2 + $0x10] sm:$0xff]
    %v35 = vld [vmem:[%s2 + $0x18] sm:$0xff]
    %37 = vset.pattern.permute.xlu0 0
    %38 = vperm.xlu0 %37, %v32
    %v39 = vpop.permute.xlu0 %38
    %42 = vset.pattern.permute.xlu0 0
    %43 = vperm.xlu0 %42, %v33
    %v44 = vpop.permute.xlu0 %43
    %47 = vset.pattern.permute.xlu0 0
    %48 = vperm.xlu0 %47, %v34
    %v49 = vpop.permute.xlu0 %48
    %52 = vset.pattern.permute.xlu0 0
    %53 = vperm.xlu0 %52, %v35
    %v54 = vpop.permute.xlu0 %53
    %vm56 = vcmask 15360
    %v58 = vsel %vm56, %v28, 0
    %v61 = vsel %vm56, %v29, 0
    %v64 = vsel %vm56, %v30, 0
    %v67 = vsel %vm56, %v31, 0
    %vm69 = vcmask 1041408
    %v71 = vsel %vm69, %v27, 0
    %73 = vmatprep.subr.mxu0 0.0
    %74 = vmatpush1.msra.mxu0 %v71
    %75 = vmatprep.subr.mxu0 0.0
    %76 = vmatpush1.msra.mxu0 0.0
    %77 = vmatprep.subr.mxu0 0.0
    %78 = vmatpush1.msra.mxu0 0.0
    %79 = vmatprep.subr.mxu0 0.0
    %80 = vmatpush1.msra.mxu0 0.0
    %81 = vmatprep.subr.mxu0 0.0
    %82 = vmatpush1.msra.mxu0 0.0
    %83 = vmatprep.subr.mxu0 0.0
    %84 = vmatpush1.msra.mxu0 0.0
    %85 = vmatprep.subr.mxu0 0.0
    %86 = vmatpush1.msra.mxu0 0.0
    %87 = vmatprep.subr.mxu0 0.0
    %88 = vmatpush1.msra.mxu0 0.0
    %89 = vmatprep.subr.mxu0 0.0
    %90 = vmatpush1.msra.mxu0 0.0
    %91 = vmatprep.subr.mxu0 0.0
    %92 = vmatpush1.msra.mxu0 0.0
    %93 = vmatprep.subr.mxu0 0.0
    %94 = vmatpush1.msra.mxu0 0.0
    %95 = vmatprep.subr.mxu0 0.0
    %96 = vmatpush1.msra.mxu0 0.0
    %97 = vmatprep.subr.mxu0 0.0
    %98 = vmatpush1.msra.mxu0 0.0
    %99 = vmatprep.subr.mxu0 0.0
    %100 = vmatpush1.msra.mxu0 0.0
    %101 = vmatprep.subr.mxu0 0.0
    %102 = vmatpush1.msra.mxu0 0.0
    %103 = vmatprep.subr.mxu0 0.0
    %104 = vmatpush1.msra.mxu0 0.0
    %105 = vmatprep.subr.mxu0 0.0
    %106 = vmatpush1.msra.mxu0 0.0
    %107 = vmatprep.subr.mxu0 0.0
    %108 = vmatpush1.msra.mxu0 0.0
    %109 = vmatprep.subr.mxu0 0.0
    %110 = vmatpush1.msra.mxu0 0.0
    %111 = vmatprep.subr.mxu0 0.0
    %112 = vmatpush1.msra.mxu0 0.0
    %113 = vmatprep.subr.mxu0 0.0
    %114 = vmatpush1.msra.mxu0 0.0
    %115 = vmatprep.subr.mxu0 0.0
    %116 = vmatpush1.msra.mxu0 0.0
    %117 = vmatprep.subr.mxu0 0.0
    %118 = vmatpush1.msra.mxu0 0.0
    %119 = vmatprep.subr.mxu0 0.0
    %120 = vmatpush1.msra.mxu0 0.0
    %121 = vmatprep.subr.mxu0 0.0
    %122 = vmatpush1.msra.mxu0 0.0
    %123 = vmatprep.subr.mxu0 0.0
    %124 = vmatpush1.msra.mxu0 0.0
    %125 = vmatprep.subr.mxu0 0.0
    %126 = vmatpush1.msra.mxu0 0.0
    %127 = vmatprep.subr.mxu0 0.0
    %128 = vmatpush1.msra.mxu0 0.0
    %129 = vmatprep.subr.mxu0 0.0
    %130 = vmatpush1.msra.mxu0 0.0
    %131 = vmatprep.subr.mxu0 0.0
    %132 = vmatpush1.msra.mxu0 0.0
    %133 = vmatprep.subr.mxu0 0.0
    %134 = vmatpush1.msra.mxu0 0.0
    %135 = vmatprep.subr.mxu0 0.0
    %136 = vmatpush1.msra.mxu0 0.0
    %137 = vmatprep.mubr.f32.mxu0 0.0
    %138 = vmatmul.mubr.f32.gmra.mrb[0].mxu0 %v58
    %v139 = vpop.f32.mrb[0].mxu0
    %v140 = vadd.f32 %v39, %v139
    %v141 = vpop.f32.mrb[0].mxu0
    %142 = vmatprep.mubr.f32.mxu0 0.0
    %143 = vmatmul.mubr.f32.gmra.mrb[0].mxu0 %v61
    %v144 = vpop.f32.mrb[0].mxu0
    %v145 = vadd.f32 %v44, %v144
    %v146 = vpop.f32.mrb[0].mxu0
    %147 = vmatprep.mubr.f32.mxu0 0.0
    %148 = vmatmul.mubr.f32.gmra.mrb[0].mxu0 %v64
    %v149 = vpop.f32.mrb[0].mxu0
    %v150 = vadd.f32 %v49, %v149
    %v151 = vpop.f32.mrb[0].mxu0
    %152 = vmatprep.mubr.f32.mxu0 0.0
    %153 = vmatmul.mubr.f32.gmra.mrb[0].mxu0 %v67
    %v154 = vpop.f32.mrb[0].mxu0
    %v155 = vadd.f32 %v54, %v154
    %v156 = vpop.f32.mrb[0].mxu0
    %157 = vdwg.mxu0
    %v158 = vtanh.pop %v140
    %v159 = vtanh.pop %v145
    %v160 = vtanh.pop %v150
    %v161 = vtanh.pop %v155
    %v162 = vld [vmem:[%s3] sm:$0xff]
    %v163 = vld [vmem:[%s3 + $0x8] sm:$0xff]
    %v164 = vld [vmem:[%s3 + $0x10] sm:$0xff]
    %v165 = vld [vmem:[%s3 + $0x18] sm:$0xff]
    %v166 = vld [vmem:[%s4] sm:$0xff]
    %v167 = vld [vmem:[%s4 + $0x8] sm:$0xff]
    %v168 = vld [vmem:[%s4 + $0x10] sm:$0xff]
    %v169 = vld [vmem:[%s4 + $0x18] sm:$0xff]
    %171 = vset.pattern.permute.xlu0 0
    %172 = vperm.xlu0 %171, %v166
    %v173 = vpop.permute.xlu0 %172
    %176 = vset.pattern.permute.xlu0 0
    %177 = vperm.xlu0 %176, %v167
    %v178 = vpop.permute.xlu0 %177
    %181 = vset.pattern.permute.xlu0 0
    %182 = vperm.xlu0 %181, %v168
    %v183 = vpop.permute.xlu0 %182
    %186 = vset.pattern.permute.xlu0 0
    %187 = vperm.xlu0 %186, %v169
    %v188 = vpop.permute.xlu0 %187
    %vm190 = vcmask 261120
    %v192 = vsel %vm190, %v162, 0
    %v195 = vsel %vm190, %v163, 0
    %v198 = vsel %vm190, %v164, 0
    %v201 = vsel %vm190, %v165, 0
    %203 = vmatprep.subr.mxu0 0.0
    %204 = vmatpush1.msra.mxu0 %v158
    %205 = vmatprep.subr.mxu0 0.0
    %206 = vmatpush1.msra.mxu0 %v159
    %207 = vmatprep.subr.mxu0 0.0
    %208 = vmatpush1.msra.mxu0 %v160
    %209 = vmatprep.subr.mxu0 0.0
    %210 = vmatpush1.msra.mxu0 %v161
    %211 = vmatprep.subr.mxu0 0.0
    %212 = vmatpush1.msra.mxu0 0.0
    %213 = vmatprep.subr.mxu0 0.0
    %214 = vmatpush1.msra.mxu0 0.0
    %215 = vmatprep.subr.mxu0 0.0
    %216 = vmatpush1.msra.mxu0 0.0
    %217 = vmatprep.subr.mxu0 0.0
    %218 = vmatpush1.msra.mxu0 0.0
    %219 = vmatprep.subr.mxu0 0.0
    %220 = vmatpush1.msra.mxu0 0.0
    %221 = vmatprep.subr.mxu0 0.0
    %222 = vmatpush1.msra.mxu0 0.0
    %223 = vmatprep.subr.mxu0 0.0
    %224 = vmatpush1.msra.mxu0 0.0
    %225 = vmatprep.subr.mxu0 0.0
    %226 = vmatpush1.msra.mxu0 0.0
    %227 = vmatprep.subr.mxu0 0.0
    %228 = vmatpush1.msra.mxu0 0.0
    %229 = vmatprep.subr.mxu0 0.0
    %230 = vmatpush1.msra.mxu0 0.0
    %231 = vmatprep.subr.mxu0 0.0
    %232 = vmatpush1.msra.mxu0 0.0
    %233 = vmatprep.subr.mxu0 0.0
    %234 = vmatpush1.msra.mxu0 0.0
    %235 = vmatprep.subr.mxu0 0.0
    %236 = vmatpush1.msra.mxu0 0.0
    %237 = vmatprep.subr.mxu0 0.0
    %238 = vmatpush1.msra.mxu0 0.0
    %239 = vmatprep.subr.mxu0 0.0
    %240 = vmatpush1.msra.mxu0 0.0
    %241 = vmatprep.subr.mxu0 0.0
    %242 = vmatpush1.msra.mxu0 0.0
    %243 = vmatprep.subr.mxu0 0.0
    %244 = vmatpush1.msra.mxu0 0.0
    %245 = vmatprep.subr.mxu0 0.0
    %246 = vmatpush1.msra.mxu0 0.0
    %247 = vmatprep.subr.mxu0 0.0
    %248 = vmatpush1.msra.mxu0 0.0
    %249 = vmatprep.subr.mxu0 0.0
    %250 = vmatpush1.msra.mxu0 0.0
    %251 = vmatprep.subr.mxu0 0.0
    %252 = vmatpush1.msra.mxu0 0.0
    %253 = vmatprep.subr.mxu0 0.0
    %254 = vmatpush1.msra.mxu0 0.0
    %255 = vmatprep.subr.mxu0 0.0
    %256 = vmatpush1.msra.mxu0 0.0
    %257 = vmatprep.subr.mxu0 0.0
    %258 = vmatpush1.msra.mxu0 0.0
    %259 = vmatprep.subr.mxu0 0.0
    %260 = vmatpush1.msra.mxu0 0.0
    %261 = vmatprep.subr.mxu0 0.0
    %262 = vmatpush1.msra.mxu0 0.0
    %263 = vmatprep.subr.mxu0 0.0
    %264 = vmatpush1.msra.mxu0 0.0
    %265 = vmatprep.subr.mxu0 0.0
    %266 = vmatpush1.msra.mxu0 0.0
    %267 = vmatprep.mubr.f32.mxu0 0.0
    %268 = vmatmul.mubr.f32.gmra.mrb[0].mxu0 %v192
    %v269 = vpop.f32.mrb[0].mxu0
    %v270 = vadd.f32 %v173, %v269
    %v271 = vpop.f32.mrb[0].mxu0
    %272 = vmatprep.mubr.f32.mxu0 0.0
    %273 = vmatmul.mubr.f32.gmra.mrb[0].mxu0 %v195
    %v274 = vpop.f32.mrb[0].mxu0
    %v275 = vadd.f32 %v178, %v274
    %v276 = vpop.f32.mrb[0].mxu0
    %277 = vmatprep.mubr.f32.mxu0 0.0
    %278 = vmatmul.mubr.f32.gmra.mrb[0].mxu0 %v198
    %v279 = vpop.f32.mrb[0].mxu0
    %v280 = vadd.f32 %v183, %v279
    %v281 = vpop.f32.mrb[0].mxu0
    %282 = vmatprep.mubr.f32.mxu0 0.0
    %283 = vmatmul.mubr.f32.gmra.mrb[0].mxu0 %v201
    %v284 = vpop.f32.mrb[0].mxu0
    %v285 = vadd.f32 %v188, %v284
    %v286 = vpop.f32.mrb[0].mxu0
    %287 = vdwg.mxu0
    %v288 = vtanh.pop %v270
    %v289 = vtanh.pop %v275
    %v290 = vtanh.pop %v280
    %v291 = vtanh.pop %v285
    %v292 = vld [vmem:[%s5] sm:$0x3]
    %v293 = vld [vmem:[%s6] sm:$0x3]
    %295 = vset.pattern.permute.xlu0 0
    %296 = vperm.xlu0 %295, %v293
    %v297 = vpop.permute.xlu0 %296
    %v300 = vsel %vm190, %v292, 0
    %302 = vmatprep.subr.mxu0 0.0
    %303 = vmatpush1.msra.mxu0 %v288
    %304 = vmatprep.subr.mxu0 0.0
    %305 = vmatpush1.msra.mxu0 %v289
    %306 = vmatprep.subr.mxu0 0.0
    %307 = vmatpush1.msra.mxu0 %v290
    %308 = vmatprep.subr.mxu0 0.0
    %309 = vmatpush1.msra.mxu0 %v291
    %310 = vmatprep.subr.mxu0 0.0
    %311 = vmatpush1.msra.mxu0 0.0
    %312 = vmatprep.subr.mxu0 0.0
    %313 = vmatpush1.msra.mxu0 0.0
    %314 = vmatprep.subr.mxu0 0.0
    %315 = vmatpush1.msra.mxu0 0.0
    %316 = vmatprep.subr.mxu0 0.0
    %317 = vmatpush1.msra.mxu0 0.0
    %318 = vmatprep.subr.mxu0 0.0
    %319 = vmatpush1.msra.mxu0 0.0
    %320 = vmatprep.subr.mxu0 0.0
    %321 = vmatpush1.msra.mxu0 0.0
    %322 = vmatprep.subr.mxu0 0.0
    %323 = vmatpush1.msra.mxu0 0.0
    %324 = vmatprep.subr.mxu0 0.0
    %325 = vmatpush1.msra.mxu0 0.0
    %326 = vmatprep.subr.mxu0 0.0
    %327 = vmatpush1.msra.mxu0 0.0
    %328 = vmatprep.subr.mxu0 0.0
    %329 = vmatpush1.msra.mxu0 0.0
    %330 = vmatprep.subr.mxu0 0.0
    %331 = vmatpush1.msra.mxu0 0.0
    %332 = vmatprep.subr.mxu0 0.0
    %333 = vmatpush1.msra.mxu0 0.0
    %334 = vmatprep.subr.mxu0 0.0
    %335 = vmatpush1.msra.mxu0 0.0
    %336 = vmatprep.subr.mxu0 0.0
    %337 = vmatpush1.msra.mxu0 0.0
    %338 = vmatprep.subr.mxu0 0.0
    %339 = vmatpush1.msra.mxu0 0.0
    %340 = vmatprep.subr.mxu0 0.0
    %341 = vmatpush1.msra.mxu0 0.0
    %342 = vmatprep.subr.mxu0 0.0
    %343 = vmatpush1.msra.mxu0 0.0
    %344 = vmatprep.subr.mxu0 0.0
    %345 = vmatpush1.msra.mxu0 0.0
    %346 = vmatprep.subr.mxu0 0.0
    %347 = vmatpush1.msra.mxu0 0.0
    %348 = vmatprep.subr.mxu0 0.0
    %349 = vmatpush1.msra.mxu0 0.0
    %350 = vmatprep.subr.mxu0 0.0
    %351 = vmatpush1.msra.mxu0 0.0
    %352 = vmatprep.subr.mxu0 0.0
    %353 = vmatpush1.msra.mxu0 0.0
    %354 = vmatprep.subr.mxu0 0.0
    %355 = vmatpush1.msra.mxu0 0.0
    %356 = vmatprep.subr.mxu0 0.0
    %357 = vmatpush1.msra.mxu0 0.0
    %358 = vmatprep.subr.mxu0 0.0
    %359 = vmatpush1.msra.mxu0 0.0
    %360 = vmatprep.subr.mxu0 0.0
    %361 = vmatpush1.msra.mxu0 0.0
    %362 = vmatprep.subr.mxu0 0.0
    %363 = vmatpush1.msra.mxu0 0.0
    %364 = vmatprep.subr.mxu0 0.0
    %365 = vmatpush1.msra.mxu0 0.0
    %366 = vmatprep.mubr.f32.mxu0 0.0
    %367 = vmatmul.mubr.f32.gmra.mrb[0].mxu0 %v300
    %v368 = vpop.f32.mrb[0].mxu0
    %v369 = vadd.f32 %v297, %v368
    %v370 = vpop.f32.mrb[0].mxu0
    %371 = vdwg.mxu0
    %372 = vst [vmem:[#allocation2] sm:$0x3] %v369
    // Predicated region
    $region30: #{tpu_custom_call.1} parent=1 // pred_check
      _
    $region31: #{tpu_custom_call.1} parent=1 // pred_check_branch
      %374 = sbr.rel (0) target = $region33
    $region32: #{tpu_custom_call.1} parent=1 // pred_region
      %s376 = ssub.s32 32, 32
      %377 = vsyncadd [#allocation3], %s376
      %s379 = sshll.u32 [#allocation2], 4
      %s380 = int_to_ptr.vmem [resolvable:$true] %s379
      %382 = dma.vmem_to_hbm [thread:$0]  %s380, 32, %s7, [#allocation3]
    $region33: #{tpu_custom_call.1} parent=1 // pred_fallthru
      _
    // Predicated region
    $region34: #{tpu_custom_call.1} parent=1 // pred_check
      _
    $region35: #{tpu_custom_call.1} parent=1 // pred_check_branch
      %384 = sbr.rel (0) target = $region37
    $region36: #{tpu_custom_call.1} parent=1 // pred_region
      %385 = dma.done [#allocation3], 32
    $region37: #{tpu_custom_call.1} parent=1 // pred_fallthru
      _
    %386 = vsyncpa [#allocation3], 1

</llo_original>
